<compile_context>
chip_gen: v7x
topology: tpu7x:2x2x1
jax: 0.10.0
libtpu: 0.0.40
codegen_flags: <defaults>
</compile_context>

<pallas_src>
import functools

import jax
import jax.numpy as jnp
from jax import lax
from jax.experimental import pallas as pl
from jax.experimental.pallas import tpu as pltpu


# ----------------------------------------------------------------------------
# Fused Pallas kernel: [conv3x3 + bias + ReLU] x 2, whole batch in one shot
# ----------------------------------------------------------------------------
def _gbody_fused_kernel(x_ref, w1_ref, b1_ref, w2_ref, b2_ref, o_ref, *,
                        img_rows):
    # x_ref : (N*H, W*Cin)          lane-dense activation rows (f32)
    # w1_ref: (3, W*Cin, W*Cmid)    dy-indexed, dx-banded weights (bf16)
    # b1_ref: (1, W*Cmid)           lane-dense bias row (f32)
    # w2_ref: (3, W*Cmid, W*Cout)   dy-indexed, dx-banded weights (bf16)
    # b2_ref: (1, W*Cout)           lane-dense bias row (f32)
    # o_ref : (N*H, W*Cout)         lane-dense output rows (f32)
    nh = x_ref.shape[0]

    # Per-image first/last row masks (images are stacked along the row axis,
    # img_rows rows per image) — enforce SAME zero padding along H.
    row = lax.broadcasted_iota(jnp.int32, (nh, 1), 0)
    first_row = (row % img_rows) == 0
    last_row = (row % img_rows) == (img_rows - 1)

    def conv_band(act, w_ref, b_row):
        # act: (N*H, W*Cin) f32.  out[r] = sum_dy act[r+dy-1] @ band[dy],
        # where the dx taps / width-edge truncation live inside band[dy]
        # (block-banded (W*Cin, W*Cout) matrices built in the wrapper).
        zero_row = jnp.zeros_like(act[:1])
        # prev[r] = act[r-1] (zero on the first row of each image)
        prev = jnp.where(first_row, 0.0,
                         jnp.concatenate([zero_row, act[:-1]], axis=0))
        # nxt[r] = act[r+1] (zero on the last row of each image)
        nxt = jnp.where(last_row, 0.0,
                        jnp.concatenate([act[1:], zero_row], axis=0))

        # bf16 MXU operands, f32 accumulation (elementwise stays f32).
        acc = jnp.dot(act.astype(jnp.bfloat16), w1 := w_ref[1],
                      preferred_element_type=jnp.float32)
        acc += jnp.dot(prev.astype(jnp.bfloat16), w_ref[0],
                       preferred_element_type=jnp.float32)
        acc += jnp.dot(nxt.astype(jnp.bfloat16), w_ref[2],
                       preferred_element_type=jnp.float32)
        return jnp.maximum(acc + b_row, 0.0)          # f32 bias + ReLU

    # Layer 1: (N*H, W*Cin) -> (N*H, W*Cmid); c1 stays lane-dense in VMEM.
    c1 = conv_band(x_ref[...], w1_ref, b1_ref[...])
    # Layer 2: (N*H, W*Cmid) -> (N*H, W*Cout); lands lane-dense in the output.
    o_ref[...] = conv_band(c1, w2_ref, b2_ref[...]).astype(o_ref.dtype)


def banded_conv_weights(w, img_w):
    """(3, 3, Cin, Cout) HWIO conv weight -> (3, W*Cin, W*Cout) dx-banded mats.

    band[dy, wp*Cin+ci, wq*Cout+co] = w[dy, wp-wq+1, ci, co] if |wp-wq| <= 1
    else 0.  The zero band outside |wp-wq| <= 1 also implements SAME padding
    along W (taps falling outside the image are simply absent).
    """
    kh, kw, cin, cout = w.shape
    wp = jnp.arange(img_w * cin) // cin
    ci = jnp.arange(img_w * cin) % cin
    wq = jnp.arange(img_w * cout) // cout
    co = jnp.arange(img_w * cout) % cout
    dx = wp[:, None] - wq[None, :] + 1                       # (W*Cin, W*Cout)
    valid = (dx >= 0) & (dx < kw)
    dxc = jnp.clip(dx, 0, kw - 1)
    vals = w[:, dxc, ci[:, None], co[None, :]]               # (3, W*Cin, W*Cout)
    return jnp.where(valid[None, :, :], vals, 0.0)


def fused_double_conv3x3_bias_relu(x_nhwc, *, band1, b1row, band2, b2row):
    """Fused two-layer conv3x3(+bias)+ReLU pipeline (SAME padding).

    x_nhwc: (N, H, W, Cin) float32.  band*/b*row are pre-packed in build_gbody.
    Returns (N, H, W, Cout).
    Note: tuned for small images; whole problem must fit VMEM (it is ~100 KB
    here).  Output rows are W*Cout lanes wide — a multiple of 128 keeps the
    stores unmasked (true for W=16, Cout=8).
    """
    N, H, W, Cin = x_nhwc.shape
    Cout = band2.shape[2] // W

    # Contiguous NHWC -> lane-dense rows: free XLA reshape (no data movement).
    x2d = x_nhwc.reshape(N * H, W * Cin)

    vmem = pl.BlockSpec(memory_space=pltpu.MemorySpace.VMEM)
    out2d = pl.pallas_call(
        functools.partial(_gbody_fused_kernel, img_rows=H),
        out_shape=jax.ShapeDtypeStruct((N * H, W * Cout), x_nhwc.dtype),
        in_specs=[vmem, vmem, vmem, vmem, vmem],
        out_specs=vmem,
    )(x2d, band1, b1row, band2, b2row)

    # Lane-dense rows back to NHWC: free reshape of contiguous output.
    return out2d.reshape(N, H, W, Cout)


# ----------------------------------------------------------------------------
# GBody container semantics (feature-dict threading + collect)
# ----------------------------------------------------------------------------
# TODO(synk): build_component/build_brick config-registry construction has no
# kernel equivalent; a concrete conv+ReLU pipeline is instantiated instead.
class Component:
    def __init__(self, from_layer, to_layer, fn):
        self.from_layer = from_layer
        self.to_layer = to_layer
        self._fn = fn

    def __call__(self, *args, **kwargs):
        return self._fn(*args, **kwargs)


class CollectBlock:
    def __init__(self, from_layer):
        self.from_layer = from_layer

    def __call__(self, feats):
        return feats[self.from_layer]


class GBody:
    """JAX re-implementation of vedastr GBody.forward semantics."""

    def __init__(self, components, collect=None):
        self.input_to_layer = 'input'
        self.components = components
        self.collect = collect

    @property
    def with_collect(self):
        return self.collect is not None

    def __call__(self, x):
        feats = {self.input_to_layer: x}
        for component in self.components:
            component_from = component.from_layer
            component_to = component.to_layer
            if isinstance(component_from, list):
                inp = {key: feats[key] for key in component_from}
                out = component(**inp)
            else:
                inp = feats[component_from]
                out = component(inp)
            feats[component_to] = out
        if self.with_collect:
            return self.collect(feats)
        else:
            return feats


# ----------------------------------------------------------------------------
# Build a concrete, deterministic pipeline and run it
# ----------------------------------------------------------------------------
def build_gbody(key, img_w, c_in=4, c_mid=8, c_out=8):
    k1, k2, k3, k4 = jax.random.split(key, 4)
    w1 = jax.random.normal(k1, (3, 3, c_in, c_mid), jnp.float32) * 0.1
    b1 = jax.random.normal(k2, (c_mid,), jnp.float32) * 0.1
    w2 = jax.random.normal(k3, (3, 3, c_mid, c_out), jnp.float32) * 0.1
    b2 = jax.random.normal(k4, (c_out,), jnp.float32) * 0.1

    # One-time weight/bias packing (outside the kernel, done once here):
    #  - dx-banded (W*Cin, W*Cout) weight matrices per dy, cast to bf16
    #  - lane-dense (1, W*C) bias rows in f32
    band1 = banded_conv_weights(w1, img_w).astype(jnp.bfloat16)
    band2 = banded_conv_weights(w2, img_w).astype(jnp.bfloat16)
    b1row = jnp.tile(b1, (img_w,)).reshape(1, img_w * c_mid)
    b2row = jnp.tile(b2, (img_w,)).reshape(1, img_w * c_out)

    fused = Component(
        'input', 'c2',
        functools.partial(fused_double_conv3x3_bias_relu,
                          band1=band1, b1row=b1row, band2=band2, b2row=b2row))
    body = GBody([fused], collect=CollectBlock('c2'))
    params = (w1, b1, w2, b2)
    return body, params


def reference_forward(x_nhwc, params):
    """Pure-JAX reference with matching precision (bf16 operands, f32 acc)."""
    w1, b1, w2, b2 = params

    def conv(x, w, b):
        y = lax.conv_general_dilated(
            x.astype(jnp.bfloat16), w.astype(jnp.bfloat16),
            window_strides=(1, 1), padding='SAME',
            dimension_numbers=('NHWC', 'HWIO', 'NHWC'),
            preferred_element_type=jnp.float32)
        return jnp.maximum(y + b, 0.0)

    return conv(conv(x_nhwc, w1, b1), w2, b2)


if __name__ == "__main__":
    key = jax.random.PRNGKey(0)
    k_x, k_p = jax.random.split(key)

    # NHWC at the call boundary (per review: avoids NCHW<->NHWC HBM passes).
    N, H, W, C = 2, 16, 16, 4
    x_nhwc = jax.random.normal(k_x, (N, H, W, C), jnp.float32)

    body, params = build_gbody(k_p, img_w=W, c_in=C, c_mid=8, c_out=8)

    out = body(x_nhwc)
    out = jax.block_until_ready(out)

    # Sanity check against a pure-JAX reference of the same pipeline.
    ref = reference_forward(x_nhwc, params)
    assert out.shape == (N, H, W, 8)
    err = float(jnp.max(jnp.abs(out - ref)))
    assert jnp.allclose(out, ref, atol=2e-3, rtol=2e-3), f"max abs err {err}"

    print("KERNEL_OK")
</pallas_src>

<mosaic_0001>
module attributes {stable_mosaic.version = 11 : i64} {
  func.func @_gbody_fused_kernel(%arg0: memref<32x64xf32, #tpu.memory_space<vmem>>, %arg1: memref<3x64x128xbf16, #tpu.memory_space<vmem>>, %arg2: memref<1x128xf32, #tpu.memory_space<vmem>>, %arg3: memref<3x128x128xbf16, #tpu.memory_space<vmem>>, %arg4: memref<1x128xf32, #tpu.memory_space<vmem>>, %arg5: memref<32x128xf32, #tpu.memory_space<vmem>>) attributes {dimension_semantics = [], scalar_prefetch = 0 : i64, scratch_operands = 0 : i64, tpu.core_type = #tpu.core_type<tc>} {
    %0 = tpu.iota {dimensions = array<i32: 0>} : vector<32x1xi32>
    %c16_i32 = arith.constant 16 : i32
    %c0_i32 = arith.constant 0 : i32
    %1 = arith.cmpi eq, %c16_i32, %c0_i32 : i32
    %c1_i32 = arith.constant 1 : i32
    %2 = arith.select %1, %c1_i32, %c16_i32 : i32
    %3 = vector.broadcast %2 : i32 to vector<32x1xi32>
    %4 = arith.remsi %0, %3 : vector<32x1xi32>
    %c0_i32_0 = arith.constant 0 : i32
    %5 = vector.broadcast %c0_i32_0 : i32 to vector<32x1xi32>
    %6 = arith.cmpi ne, %4, %5 : vector<32x1xi32>
    %c0_i32_1 = arith.constant 0 : i32
    %7 = vector.broadcast %c0_i32_1 : i32 to vector<32x1xi32>
    %8 = arith.cmpi slt, %4, %7 : vector<32x1xi32>
    %c0_i32_2 = arith.constant 0 : i32
    %9 = arith.cmpi slt, %2, %c0_i32_2 : i32
    %10 = vector.broadcast %9 : i1 to vector<32x1xi1>
    %11 = vector.broadcast %10 : vector<32x1xi1> to vector<32x1xi1>
    %12 = arith.xori %8, %11 : vector<32x1xi1>
    %13 = arith.andi %12, %6 : vector<32x1xi1>
    %14 = vector.broadcast %2 : i32 to vector<32x1xi32>
    %15 = arith.addi %4, %14 : vector<32x1xi32>
    %16 = arith.select %13, %15, %4 : vector<32x1xi1>, vector<32x1xi32>
    %c0_i32_3 = arith.constant 0 : i32
    %17 = vector.broadcast %c0_i32_3 : i32 to vector<32x1xi32>
    %18 = arith.cmpi eq, %16, %17 : vector<32x1xi32>
    %c16_i32_4 = arith.constant 16 : i32
    %c0_i32_5 = arith.constant 0 : i32
    %19 = arith.cmpi eq, %c16_i32_4, %c0_i32_5 : i32
    %c1_i32_6 = arith.constant 1 : i32
    %20 = arith.select %19, %c1_i32_6, %c16_i32_4 : i32
    %21 = vector.broadcast %20 : i32 to vector<32x1xi32>
    %22 = arith.remsi %0, %21 : vector<32x1xi32>
    %c0_i32_7 = arith.constant 0 : i32
    %23 = vector.broadcast %c0_i32_7 : i32 to vector<32x1xi32>
    %24 = arith.cmpi ne, %22, %23 : vector<32x1xi32>
    %c0_i32_8 = arith.constant 0 : i32
    %25 = vector.broadcast %c0_i32_8 : i32 to vector<32x1xi32>
    %26 = arith.cmpi slt, %22, %25 : vector<32x1xi32>
    %c0_i32_9 = arith.constant 0 : i32
    %27 = arith.cmpi slt, %20, %c0_i32_9 : i32
    %28 = vector.broadcast %27 : i1 to vector<32x1xi1>
    %29 = vector.broadcast %28 : vector<32x1xi1> to vector<32x1xi1>
    %30 = arith.xori %26, %29 : vector<32x1xi1>
    %31 = arith.andi %30, %24 : vector<32x1xi1>
    %32 = vector.broadcast %20 : i32 to vector<32x1xi32>
    %33 = arith.addi %22, %32 : vector<32x1xi32>
    %34 = arith.select %31, %33, %22 : vector<32x1xi1>, vector<32x1xi32>
    %c15_i32 = arith.constant 15 : i32
    %35 = vector.broadcast %c15_i32 : i32 to vector<32x1xi32>
    %36 = arith.cmpi eq, %34, %35 : vector<32x1xi32>
    %c0 = arith.constant 0 : index
    %c0_10 = arith.constant 0 : index
    %37 = vector.load %arg0[%c0, %c0_10] : memref<32x64xf32, #tpu.memory_space<vmem>>, vector<32x64xf32>
    %c0_11 = arith.constant 0 : index
    %c0_12 = arith.constant 0 : index
    %38 = vector.load %arg2[%c0_11, %c0_12] : memref<1x128xf32, #tpu.memory_space<vmem>>, vector<1x128xf32>
    %cst = arith.constant 0.000000e+00 : f32
    %39 = vector.broadcast %cst : f32 to vector<1x64xf32>
    %40 = vector.extract_strided_slice %37 {offsets = [0, 0], sizes = [31, 64], strides = [1, 1]} : vector<32x64xf32> to vector<31x64xf32>
    %41 = tpu.concatenate %39, %40 in 0 : vector<1x64xf32>, vector<31x64xf32> -> vector<32x64xf32>
    %cst_13 = arith.constant 0.000000e+00 : f32
    %42 = vector.shape_cast %18 : vector<32x1xi1> to vector<32x1xi1>
    %43 = vector.broadcast %42 : vector<32x1xi1> to vector<32x64xi1>
    %44 = vector.broadcast %cst_13 : f32 to vector<32x64xf32>
    %45 = arith.select %43, %44, %41 : vector<32x64xi1>, vector<32x64xf32>
    %46 = vector.extract_strided_slice %37 {offsets = [1, 0], sizes = [31, 64], strides = [1, 1]} : vector<32x64xf32> to vector<31x64xf32>
    %47 = tpu.concatenate %46, %39 in 0 : vector<31x64xf32>, vector<1x64xf32> -> vector<32x64xf32>
    %cst_14 = arith.constant 0.000000e+00 : f32
    %48 = vector.shape_cast %36 : vector<32x1xi1> to vector<32x1xi1>
    %49 = vector.broadcast %48 : vector<32x1xi1> to vector<32x64xi1>
    %50 = vector.broadcast %cst_14 : f32 to vector<32x64xf32>
    %51 = arith.select %49, %50, %47 : vector<32x64xi1>, vector<32x64xf32>
    %52 = arith.truncf %37 : vector<32x64xf32> to vector<32x64xbf16>
    %c1 = arith.constant 1 : index
    %c0_15 = arith.constant 0 : index
    %c0_16 = arith.constant 0 : index
    %53 = vector.load %arg1[%c1, %c0_15, %c0_16] : memref<3x64x128xbf16, #tpu.memory_space<vmem>>, vector<1x64x128xbf16>
    %54 = vector.shape_cast %53 : vector<1x64x128xbf16> to vector<64x128xbf16>
    %cst_17 = arith.constant dense<0.000000e+00> : vector<32x128xf32>
    %55 = tpu.matmul %52, %54, %cst_17 {dimension_numbers = #tpu.dot_dimension_numbers<[1], [0], [0], [1], [0, 0, 1, 1], [], []>} : vector<32x64xbf16>, vector<64x128xbf16>, vector<32x128xf32> -> vector<32x128xf32>
    %56 = arith.truncf %45 : vector<32x64xf32> to vector<32x64xbf16>
    %c0_18 = arith.constant 0 : index
    %c0_19 = arith.constant 0 : index
    %c0_20 = arith.constant 0 : index
    %57 = vector.load %arg1[%c0_18, %c0_19, %c0_20] : memref<3x64x128xbf16, #tpu.memory_space<vmem>>, vector<1x64x128xbf16>
    %58 = vector.shape_cast %57 : vector<1x64x128xbf16> to vector<64x128xbf16>
    %cst_21 = arith.constant dense<0.000000e+00> : vector<32x128xf32>
    %59 = tpu.matmul %56, %58, %cst_21 {dimension_numbers = #tpu.dot_dimension_numbers<[1], [0], [0], [1], [0, 0, 1, 1], [], []>} : vector<32x64xbf16>, vector<64x128xbf16>, vector<32x128xf32> -> vector<32x128xf32>
    %60 = arith.addf %55, %59 : vector<32x128xf32>
    %61 = arith.truncf %51 : vector<32x64xf32> to vector<32x64xbf16>
    %c2 = arith.constant 2 : index
    %c0_22 = arith.constant 0 : index
    %c0_23 = arith.constant 0 : index
    %62 = vector.load %arg1[%c2, %c0_22, %c0_23] : memref<3x64x128xbf16, #tpu.memory_space<vmem>>, vector<1x64x128xbf16>
    %63 = vector.shape_cast %62 : vector<1x64x128xbf16> to vector<64x128xbf16>
    %cst_24 = arith.constant dense<0.000000e+00> : vector<32x128xf32>
    %64 = tpu.matmul %61, %63, %cst_24 {dimension_numbers = #tpu.dot_dimension_numbers<[1], [0], [0], [1], [0, 0, 1, 1], [], []>} : vector<32x64xbf16>, vector<64x128xbf16>, vector<32x128xf32> -> vector<32x128xf32>
    %65 = arith.addf %60, %64 : vector<32x128xf32>
    %66 = vector.broadcast %38 : vector<1x128xf32> to vector<32x128xf32>
    %67 = arith.addf %65, %66 : vector<32x128xf32>
    %cst_25 = arith.constant 0.000000e+00 : f32
    %68 = vector.broadcast %cst_25 : f32 to vector<32x128xf32>
    %69 = arith.maximumf %67, %68 : vector<32x128xf32>
    %c0_26 = arith.constant 0 : index
    %c0_27 = arith.constant 0 : index
    %70 = vector.load %arg4[%c0_26, %c0_27] : memref<1x128xf32, #tpu.memory_space<vmem>>, vector<1x128xf32>
    %cst_28 = arith.constant 0.000000e+00 : f32
    %71 = vector.broadcast %cst_28 : f32 to vector<1x128xf32>
    %72 = vector.extract_strided_slice %69 {offsets = [0, 0], sizes = [31, 128], strides = [1, 1]} : vector<32x128xf32> to vector<31x128xf32>
    %73 = tpu.concatenate %71, %72 in 0 : vector<1x128xf32>, vector<31x128xf32> -> vector<32x128xf32>
    %cst_29 = arith.constant 0.000000e+00 : f32
    %74 = vector.shape_cast %18 : vector<32x1xi1> to vector<32x1xi1>
    %75 = vector.broadcast %74 : vector<32x1xi1> to vector<32x128xi1>
    %76 = vector.broadcast %cst_29 : f32 to vector<32x128xf32>
    %77 = arith.select %75, %76, %73 : vector<32x128xi1>, vector<32x128xf32>
    %78 = vector.extract_strided_slice %69 {offsets = [1, 0], sizes = [31, 128], strides = [1, 1]} : vector<32x128xf32> to vector<31x128xf32>
    %79 = tpu.concatenate %78, %71 in 0 : vector<31x128xf32>, vector<1x128xf32> -> vector<32x128xf32>
    %cst_30 = arith.constant 0.000000e+00 : f32
    %80 = vector.shape_cast %36 : vector<32x1xi1> to vector<32x1xi1>
    %81 = vector.broadcast %80 : vector<32x1xi1> to vector<32x128xi1>
    %82 = vector.broadcast %cst_30 : f32 to vector<32x128xf32>
    %83 = arith.select %81, %82, %79 : vector<32x128xi1>, vector<32x128xf32>
    %84 = arith.truncf %69 : vector<32x128xf32> to vector<32x128xbf16>
    %c1_31 = arith.constant 1 : index
    %c0_32 = arith.constant 0 : index
    %c0_33 = arith.constant 0 : index
    %85 = vector.load %arg3[%c1_31, %c0_32, %c0_33] : memref<3x128x128xbf16, #tpu.memory_space<vmem>>, vector<1x128x128xbf16>
    %86 = vector.shape_cast %85 : vector<1x128x128xbf16> to vector<128x128xbf16>
    %cst_34 = arith.constant dense<0.000000e+00> : vector<32x128xf32>
    %87 = tpu.matmul %84, %86, %cst_34 {dimension_numbers = #tpu.dot_dimension_numbers<[1], [0], [0], [1], [0, 0, 1, 1], [], []>} : vector<32x128xbf16>, vector<128x128xbf16>, vector<32x128xf32> -> vector<32x128xf32>
    %88 = arith.truncf %77 : vector<32x128xf32> to vector<32x128xbf16>
    %c0_35 = arith.constant 0 : index
    %c0_36 = arith.constant 0 : index
    %c0_37 = arith.constant 0 : index
    %89 = vector.load %arg3[%c0_35, %c0_36, %c0_37] : memref<3x128x128xbf16, #tpu.memory_space<vmem>>, vector<1x128x128xbf16>
    %90 = vector.shape_cast %89 : vector<1x128x128xbf16> to vector<128x128xbf16>
    %cst_38 = arith.constant dense<0.000000e+00> : vector<32x128xf32>
    %91 = tpu.matmul %88, %90, %cst_38 {dimension_numbers = #tpu.dot_dimension_numbers<[1], [0], [0], [1], [0, 0, 1, 1], [], []>} : vector<32x128xbf16>, vector<128x128xbf16>, vector<32x128xf32> -> vector<32x128xf32>
    %92 = arith.addf %87, %91 : vector<32x128xf32>
    %93 = arith.truncf %83 : vector<32x128xf32> to vector<32x128xbf16>
    %c2_39 = arith.constant 2 : index
    %c0_40 = arith.constant 0 : index
    %c0_41 = arith.constant 0 : index
    %94 = vector.load %arg3[%c2_39, %c0_40, %c0_41] : memref<3x128x128xbf16, #tpu.memory_space<vmem>>, vector<1x128x128xbf16>
    %95 = vector.shape_cast %94 : vector<1x128x128xbf16> to vector<128x128xbf16>
    %cst_42 = arith.constant dense<0.000000e+00> : vector<32x128xf32>
    %96 = tpu.matmul %93, %95, %cst_42 {dimension_numbers = #tpu.dot_dimension_numbers<[1], [0], [0], [1], [0, 0, 1, 1], [], []>} : vector<32x128xbf16>, vector<128x128xbf16>, vector<32x128xf32> -> vector<32x128xf32>
    %97 = arith.addf %92, %96 : vector<32x128xf32>
    %98 = vector.broadcast %70 : vector<1x128xf32> to vector<32x128xf32>
    %99 = arith.addf %97, %98 : vector<32x128xf32>
    %cst_43 = arith.constant 0.000000e+00 : f32
    %100 = vector.broadcast %cst_43 : f32 to vector<32x128xf32>
    %101 = arith.maximumf %99, %100 : vector<32x128xf32>
    %c0_44 = arith.constant 0 : index
    %c0_45 = arith.constant 0 : index
    %102 = vector.load %arg5[%c0_44, %c0_45] : memref<32x128xf32, #tpu.memory_space<vmem>>, vector<32x128xf32>
    tpu.vector_store %arg5[%c0_44, %c0_45], %101 {strides = array<i32>} : memref<32x128xf32, #tpu.memory_space<vmem>>, vector<32x128xf32>,
    return
  }
}

</mosaic_0001>

<llo_original>
// kernel: tpu_custom_call.1
$region0: #{tpu_custom_call.1}
  #allocation0 [shape = 'u32[]', space=smem, size = 0x4, offset = 0x4, fixed_abs, tag = 'smem constant byte address 0x4 - core index']
  #allocation1 [shape = 'u32[144,128]{1,0:T(1,128)}', space=vmem, size = 0x12000, scoped, tag = 'internal scratch']
  %s0 = inlined_call_operand.hbm [shape: f32[32,64], index: 0, kind: input, shape index: {}]
  %s1 = inlined_call_operand.hbm [shape: bf16[3,64,128], index: 1, kind: input, shape index: {}]
  %s2 = inlined_call_operand.vmem [shape: f32[1,128], index: 2, kind: input, shape index: {}]
  %s3 = inlined_call_operand.hbm [shape: bf16[3,128,128], index: 3, kind: input, shape index: {}]
  %s4 = inlined_call_operand.vmem [shape: f32[1,128], index: 4, kind: input, shape index: {}]
  %s5 = inlined_call_operand.hbm [shape: f32[32,128], index: 5, kind: output, shape index: {}]
  %s6 = sld [smem:[#allocation0]]
  $region42: #{tpu_custom_call.1} parent=0
    _
  %s8 = ssub.s32 1, %s6
  %s9 = scalar_select 0, %s8, %s6
  $region1: #{tpu_custom_call.1} parent=0
    #allocation2 [shape = 'u8[16384]{0}', space=vmem, size = 0x4000, scoped, tag = 'input window, operand 0, single buffered']
    #allocation3 [shape = 's32[1]{0}', space=sflag, size = 0x4, scoped, tag = 'scoped memory for tpu_custom_call.1']
    #allocation4 [shape = 's32[1]{0}', space=sflag, size = 0x4, scoped, tag = 'scoped memory for tpu_custom_call.1']
    #allocation5 [shape = 'u8[49152]{0}', space=vmem, size = 0xc000, scoped, tag = 'input window, operand 1, single buffered']
    #allocation6 [shape = 's32[1]{0}', space=sflag, size = 0x4, scoped, tag = 'scoped memory for tpu_custom_call.1']
    #allocation7 [shape = 'u8[98304]{0}', space=vmem, size = 0x18000, scoped, tag = 'input window, operand 3, single buffered']
    #allocation8 [shape = 'u8[16384]{0}', space=vmem, size = 0x4000, scoped, tag = 'output window, operand 0, single buffered']
    %10 = vsyncpa [#allocation3], 0
    %11 = vsyncpa [#allocation6], 0
    %12 = vsyncpa [#allocation4], 0
    // Predicated region
    $region2: #{tpu_custom_call.1} parent=1 // pred_check
      _
    $region3: #{tpu_custom_call.1} parent=1 // pred_check_branch
      %14 = sbr.rel (0) target = $region5
    $region4: #{tpu_custom_call.1} parent=1 // pred_region
      %s16 = ssub.s32 512, 512
      %17 = vsyncadd [#allocation3], %s16
      %s18 = sshll.u32 [#allocation2], 4
      %s19 = int_to_ptr.vmem [resolvable:$true] %s18
      %24 = dma.hbm_to_vmem [thread:$0]  %s0, 512, %s19, [#allocation3], 128, 128, 8
    $region5: #{tpu_custom_call.1} parent=1 // pred_fallthru
      _
    // Predicated region
    $region6: #{tpu_custom_call.1} parent=1 // pred_check
      _
    $region7: #{tpu_custom_call.1} parent=1 // pred_check_branch
      %26 = sbr.rel (0) target = $region9
    $region8: #{tpu_custom_call.1} parent=1 // pred_region
      %s28 = ssub.s32 1536, 1536
      %29 = vsyncadd [#allocation6], %s28
      %s30 = sshll.u32 [#allocation5], 4
      %s31 = int_to_ptr.vmem [resolvable:$true] %s30
      %36 = dma.hbm_to_vmem [thread:$0]  %s1, 1536, %s31, [#allocation6], 64, 64, 4
    $region9: #{tpu_custom_call.1} parent=1 // pred_fallthru
      _
    // Predicated region
    $region10: #{tpu_custom_call.1} parent=1 // pred_check
      _
    $region11: #{tpu_custom_call.1} parent=1 // pred_check_branch
      %38 = sbr.rel (0) target = $region13
    $region12: #{tpu_custom_call.1} parent=1 // pred_region
      _
    $region13: #{tpu_custom_call.1} parent=1 // pred_fallthru
      _
    // Predicated region
    $region14: #{tpu_custom_call.1} parent=1 // pred_check
      _
    $region15: #{tpu_custom_call.1} parent=1 // pred_check_branch
      %40 = sbr.rel (0) target = $region17
    $region16: #{tpu_custom_call.1} parent=1 // pred_region
      %s42 = ssub.s32 3072, 3072
      %43 = vsyncadd [#allocation6], %s42
      %s44 = sshll.u32 [#allocation7], 4
      %s45 = int_to_ptr.vmem [resolvable:$true] %s44
      %50 = dma.hbm_to_vmem [thread:$0]  %s3, 3072, %s45, [#allocation6], 64, 64, 4
    $region17: #{tpu_custom_call.1} parent=1 // pred_fallthru
      _
    // Predicated region
    $region18: #{tpu_custom_call.1} parent=1 // pred_check
      _
    $region19: #{tpu_custom_call.1} parent=1 // pred_check_branch
      %52 = sbr.rel (0) target = $region21
    $region20: #{tpu_custom_call.1} parent=1 // pred_region
      _
    $region21: #{tpu_custom_call.1} parent=1 // pred_fallthru
      _
    // Predicated region
    $region22: #{tpu_custom_call.1} parent=1 // pred_check
      _
    $region23: #{tpu_custom_call.1} parent=1 // pred_check_branch
      %54 = sbr.rel (0) target = $region25
    $region24: #{tpu_custom_call.1} parent=1 // pred_region
      %55 = dma.done [#allocation3], 512
    $region25: #{tpu_custom_call.1} parent=1 // pred_fallthru
      _
    // Predicated region
    $region26: #{tpu_custom_call.1} parent=1 // pred_check
      _
    $region27: #{tpu_custom_call.1} parent=1 // pred_check_branch
      %57 = sbr.rel (0) target = $region29
    $region28: #{tpu_custom_call.1} parent=1 // pred_region
      %58 = dma.done [#allocation6], 1536
    $region29: #{tpu_custom_call.1} parent=1 // pred_fallthru
      _
    // Predicated region
    $region30: #{tpu_custom_call.1} parent=1 // pred_check
      _
    $region31: #{tpu_custom_call.1} parent=1 // pred_check_branch
      %60 = sbr.rel (0) target = $region33
    $region32: #{tpu_custom_call.1} parent=1 // pred_region
      %61 = dma.done [#allocation6], 3072
    $region33: #{tpu_custom_call.1} parent=1 // pred_fallthru
      _
    %v63 = vlaneseq
    %v64 = vshrl.u32 %v63, 7
    %v65 = vadd.s32 %v64, 8
    %v66 = vadd.s32 %v64, 16
    %v67 = vadd.s32 %v64, 24
    %vm68 = vcmp.lt.s32.totalorder %v64, 0
    %v69 = vsub.s32 0, %v64
    %v70 = vsel %vm68, %v69, %v64
    %v71 = vshrl.u32 %v70, 4
    %v72 = vand.u32 %v70, 15
    %v73 = vsub.s32 0, %v72
    %v74 = vsel %vm68, %v73, %v72
    %vm75 = vcmp.lt.s32.totalorder %v65, 0
    %v76 = vsub.s32 0, %v65
    %v77 = vsel %vm75, %v76, %v65
    %v78 = vshrl.u32 %v77, 4
    %v79 = vand.u32 %v77, 15
    %v80 = vsub.s32 0, %v79
    %v81 = vsel %vm75, %v80, %v79
    %vm82 = vcmp.lt.s32.totalorder %v66, 0
    %v83 = vsub.s32 0, %v66
    %v84 = vsel %vm82, %v83, %v66
    %v85 = vshrl.u32 %v84, 4
    %v86 = vand.u32 %v84, 15
    %v87 = vsub.s32 0, %v86
    %v88 = vsel %vm82, %v87, %v86
    %vm89 = vcmp.lt.s32.totalorder %v67, 0
    %v90 = vsub.s32 0, %v67
    %v91 = vsel %vm89, %v90, %v67
    %v92 = vshrl.u32 %v91, 4
    %v93 = vand.u32 %v91, 15
    %v94 = vsub.s32 0, %v93
    %v95 = vsel %vm89, %v94, %v93
    %vm96 = vcmp.ne.s32.totalorder %v74, 0
    %vm97 = vcmp.ne.s32.totalorder %v81, 0
    %vm98 = vcmp.ne.s32.totalorder %v88, 0
    %vm99 = vcmp.ne.s32.totalorder %v95, 0
    %vm100 = vcmp.lt.s32.totalorder %v74, 0
    %vm101 = vcmp.lt.s32.totalorder %v81, 0
    %vm102 = vcmp.lt.s32.totalorder %v88, 0
    %vm103 = vcmp.lt.s32.totalorder %v95, 0
    %vm104 = vmand %vm100, %vm96
    %vm105 = vmand %vm101, %vm97
    %vm106 = vmand %vm102, %vm98
    %vm107 = vmand %vm103, %vm99
    %v108 = vadd.s32 %v74, 16
    %v109 = vadd.s32 %v81, 16
    %v110 = vadd.s32 %v88, 16
    %v111 = vadd.s32 %v95, 16
    %v112 = vsel %vm104, %v108, %v74
    %v113 = vsel %vm105, %v109, %v81
    %v114 = vsel %vm106, %v110, %v88
    %v115 = vsel %vm107, %v111, %v95
    %vm116 = vcmp.eq.s32.totalorder %v112, 0
    %vm117 = vcmp.eq.s32.totalorder %v113, 0
    %vm118 = vcmp.eq.s32.totalorder %v114, 0
    %vm119 = vcmp.eq.s32.totalorder %v115, 0
    %vm120 = vcmp.eq.s32.totalorder %v112, 15
    %vm121 = vcmp.eq.s32.totalorder %v113, 15
    %vm122 = vcmp.eq.s32.totalorder %v114, 15
    %vm123 = vcmp.eq.s32.totalorder %v115, 15
    %v124 = vld [vmem:[#allocation2] sm:$0xff]
    %v125 = vld [vmem:[#allocation2 + $0x8] sm:$0xff]
    %v126 = vld [vmem:[#allocation2 + $0x10] sm:$0xff]
    %v127 = vld [vmem:[#allocation2 + $0x18] sm:$0xff]
    %v128 = vld [vmem:[%s2] sm:$0x1]
    %vm133 = vcmask 1040384
    %v134 = vrot.slane %v124, 7
    %v135 = vrot.slane %v125, 7
    %v136 = vsel %vm133, %v134, %v135
    %v137 = vrot.slane %v126, 7
    %v138 = vsel %vm133, %v135, %v137
    %v139 = vrot.slane %v127, 7
    %v140 = vsel %vm133, %v137, %v139
    %v145 = vsel %vm133, 0.0, %v134
    %v146 = vsel %vm116, 1, 0
    %v147 = vsel %vm117, 1, 0
    %v148 = vsel %vm118, 1, 0
    %v149 = vsel %vm119, 1, 0
    %vm150 = vcmp.eq.s32.totalorder %v146, 1
    %vm151 = vcmp.eq.s32.totalorder %v147, 1
    %vm152 = vcmp.eq.s32.totalorder %v148, 1
    %vm153 = vcmp.eq.s32.totalorder %v149, 1
    %v154 = vsel %vm150, 0.0, %v145
    %v155 = vsel %vm151, 0.0, %v136
    %v156 = vsel %vm152, 0.0, %v138
    %v157 = vsel %vm153, 0.0, %v140
    %vm158 = vcmask 1046528
    %v159 = vrot.slane %v124, 1
    %v160 = vrot.slane %v125, 1
    %v161 = vsel %vm158, %v159, %v160
    %v162 = vrot.slane %v126, 1
    %v163 = vsel %vm158, %v160, %v162
    %v164 = vrot.slane %v127, 1
    %v165 = vsel %vm158, %v162, %v164
    %v170 = vsel %vm158, %v164, 0.0
    %v171 = vsel %vm120, 1, 0
    %v172 = vsel %vm121, 1, 0
    %v173 = vsel %vm122, 1, 0
    %v174 = vsel %vm123, 1, 0
    %vm175 = vcmp.eq.s32.totalorder %v171, 1
    %vm176 = vcmp.eq.s32.totalorder %v172, 1
    %vm177 = vcmp.eq.s32.totalorder %v173, 1
    %vm178 = vcmp.eq.s32.totalorder %v174, 1
    %v179 = vsel %vm175, 0.0, %v161
    %v180 = vsel %vm176, 0.0, %v163
    %v181 = vsel %vm177, 0.0, %v165
    %v182 = vsel %vm178, 0.0, %v170
    %v183 = vpack.c.bf16 %v125, %v124
    %v184 = vpack.c.bf16 %v127, %v126
    %s185 = scalar_lea.vmem [#allocation5], 32
    %v186 = vld [vmem:[%s185] sm:$0xf]
    %v187 = vld [vmem:[%s185 + $0x4] sm:$0xf]
    %v188 = vld [vmem:[%s185 + $0x8] sm:$0xf]
    %v189 = vld [vmem:[%s185 + $0xc] sm:$0xf]
    %v190 = vld [vmem:[%s185 + $0x10] sm:$0xf]
    %v191 = vld [vmem:[%s185 + $0x14] sm:$0xf]
    %v192 = vld [vmem:[%s185 + $0x18] sm:$0xf]
    %v193 = vld [vmem:[%s185 + $0x1c] sm:$0xf]
    %v194 = vpack.c.bf16 %v155, %v154
    %v195 = vpack.c.bf16 %v157, %v156
    %v196 = vld [vmem:[#allocation5] sm:$0xf]
    %v197 = vld [vmem:[#allocation5 + $0x4] sm:$0xf]
    %v198 = vld [vmem:[#allocation5 + $0x8] sm:$0xf]
    %v199 = vld [vmem:[#allocation5 + $0xc] sm:$0xf]
    %v200 = vld [vmem:[#allocation5 + $0x10] sm:$0xf]
    %v201 = vld [vmem:[#allocation5 + $0x14] sm:$0xf]
    %v202 = vld [vmem:[#allocation5 + $0x18] sm:$0xf]
    %v203 = vld [vmem:[#allocation5 + $0x1c] sm:$0xf]
    %v212 = vunpack.c.l.b16 %v196
    %v213 = vunpack.c.l.b16 %v197
    %v214 = vunpack.c.l.b16 %v198
    %v215 = vunpack.c.l.b16 %v199
    %v216 = vunpack.c.l.b16 %v200
    %v217 = vunpack.c.l.b16 %v201
    %v218 = vunpack.c.l.b16 %v202
    %v219 = vunpack.c.l.b16 %v203
    %v220 = vpack.c.b16 %v213, %v212
    %v221 = vpack.c.b16 %v215, %v214
    %v222 = vpack.c.b16 %v217, %v216
    %v223 = vpack.c.b16 %v219, %v218
    %vm228 = vcmask 523264
    %v230 = vsel %vm228, %v194, 0
    %v233 = vsel %vm228, %v195, 0
    %235 = vmatprep.subr.bf16.mxu0 0
    %236 = vmatpush1.bf16.msra.mxu0 %v220
    %237 = vmatprep.subr.bf16.mxu0 0
    %238 = vmatpush1.bf16.msra.mxu0 %v221
    %239 = vmatprep.subr.bf16.mxu0 0
    %240 = vmatpush1.bf16.msra.mxu0 %v222
    %241 = vmatprep.subr.bf16.mxu0 0
    %242 = vmatpush1.bf16.msra.mxu0 %v223
    %243 = vmatprep.subr.bf16.mxu0 0
    %244 = vmatpush1.bf16.msra.mxu0 0
    %245 = vmatprep.subr.bf16.mxu0 0
    %246 = vmatpush1.bf16.msra.mxu0 0
    %247 = vmatprep.subr.bf16.mxu0 0
    %248 = vmatpush1.bf16.msra.mxu0 0
    %249 = vmatprep.subr.bf16.mxu0 0
    %250 = vmatpush1.bf16.msra.mxu0 0
    %251 = vmatprep.subr.bf16.mxu0 0
    %252 = vmatpush1.bf16.msra.mxu0 0
    %253 = vmatprep.subr.bf16.mxu0 0
    %254 = vmatpush1.bf16.msra.mxu0 0
    %255 = vmatprep.subr.bf16.mxu0 0
    %256 = vmatpush1.bf16.msra.mxu0 0
    %257 = vmatprep.subr.bf16.mxu0 0
    %258 = vmatpush1.bf16.msra.mxu0 0
    %259 = vmatprep.subr.bf16.mxu0 0
    %260 = vmatpush1.bf16.msra.mxu0 0
    %261 = vmatprep.subr.bf16.mxu0 0
    %262 = vmatpush1.bf16.msra.mxu0 0
    %263 = vmatprep.subr.bf16.mxu0 0
    %264 = vmatpush1.bf16.msra.mxu0 0
    %265 = vmatprep.subr.bf16.mxu0 0
    %266 = vmatpush1.bf16.msra.mxu0 0
    %267 = vmatprep.mubr.bf16.mxu0 0
    %268 = vmatmul.mubr.bf16.gmra.mrb[0].mxu0 %v230
    %v269 = vpop.f32.mrb[0].mxu0
    %v270 = vadd.f32 0.0, %v269
    %v271 = vpop.f32.mrb[0].mxu0
    %v272 = vpop.f32.mrb[0].mxu0
    %v273 = vadd.f32 0.0, %v272
    %v274 = vpop.f32.mrb[0].mxu0
    %275 = vmatprep.mubr.bf16.mxu0 0
    %276 = vmatmul.mubr.bf16.gmra.mrb[0].mxu0 %v233
    %v277 = vpop.f32.mrb[0].mxu0
    %v278 = vadd.f32 0.0, %v277
    %v279 = vpop.f32.mrb[0].mxu0
    %v280 = vpop.f32.mrb[0].mxu0
    %v281 = vadd.f32 0.0, %v280
    %v282 = vpop.f32.mrb[0].mxu0
    %283 = vdwg.mxu0
    %v292 = vunpack.c.l.b16 %v186
    %v293 = vunpack.c.l.b16 %v187
    %v294 = vunpack.c.l.b16 %v188
    %v295 = vunpack.c.l.b16 %v189
    %v296 = vunpack.c.l.b16 %v190
    %v297 = vunpack.c.l.b16 %v191
    %v298 = vunpack.c.l.b16 %v192
    %v299 = vunpack.c.l.b16 %v193
    %v300 = vpack.c.b16 %v293, %v292
    %v301 = vpack.c.b16 %v295, %v294
    %v302 = vpack.c.b16 %v297, %v296
    %v303 = vpack.c.b16 %v299, %v298
    %v309 = vsel %vm228, %v183, 0
    %v312 = vsel %vm228, %v184, 0
    %314 = vmatprep.subr.bf16.mxu0 0
    %315 = vmatpush1.bf16.msra.mxu0 %v300
    %316 = vmatprep.subr.bf16.mxu0 0
    %317 = vmatpush1.bf16.msra.mxu0 %v301
    %318 = vmatprep.subr.bf16.mxu0 0
    %319 = vmatpush1.bf16.msra.mxu0 %v302
    %320 = vmatprep.subr.bf16.mxu0 0
    %321 = vmatpush1.bf16.msra.mxu0 %v303
    %322 = vmatprep.subr.bf16.mxu0 0
    %323 = vmatpush1.bf16.msra.mxu0 0
    %324 = vmatprep.subr.bf16.mxu0 0
    %325 = vmatpush1.bf16.msra.mxu0 0
    %326 = vmatprep.subr.bf16.mxu0 0
    %327 = vmatpush1.bf16.msra.mxu0 0
    %328 = vmatprep.subr.bf16.mxu0 0
    %329 = vmatpush1.bf16.msra.mxu0 0
    %330 = vmatprep.subr.bf16.mxu0 0
    %331 = vmatpush1.bf16.msra.mxu0 0
    %332 = vmatprep.subr.bf16.mxu0 0
    %333 = vmatpush1.bf16.msra.mxu0 0
    %334 = vmatprep.subr.bf16.mxu0 0
    %335 = vmatpush1.bf16.msra.mxu0 0
    %336 = vmatprep.subr.bf16.mxu0 0
    %337 = vmatpush1.bf16.msra.mxu0 0
    %338 = vmatprep.subr.bf16.mxu0 0
    %339 = vmatpush1.bf16.msra.mxu0 0
    %340 = vmatprep.subr.bf16.mxu0 0
    %341 = vmatpush1.bf16.msra.mxu0 0
    %342 = vmatprep.subr.bf16.mxu0 0
    %343 = vmatpush1.bf16.msra.mxu0 0
    %344 = vmatprep.subr.bf16.mxu0 0
    %345 = vmatpush1.bf16.msra.mxu0 0
    %346 = vmatprep.mubr.bf16.mxu0 0
    %347 = vmatmul.mubr.bf16.gmra.mrb[0].mxu0 %v309
    %v348 = vpop.f32.mrb[0].mxu0
    %v349 = vadd.f32 %v270, %v348
    %v350 = vpop.f32.mrb[0].mxu0
    %v351 = vpop.f32.mrb[0].mxu0
    %v352 = vadd.f32 %v273, %v351
    %v353 = vpop.f32.mrb[0].mxu0
    %354 = vmatprep.mubr.bf16.mxu0 0
    %355 = vmatmul.mubr.bf16.gmra.mrb[0].mxu0 %v312
    %v356 = vpop.f32.mrb[0].mxu0
    %v357 = vadd.f32 %v278, %v356
    %v358 = vpop.f32.mrb[0].mxu0
    %v359 = vpop.f32.mrb[0].mxu0
    %v360 = vadd.f32 %v281, %v359
    %v361 = vpop.f32.mrb[0].mxu0
    %362 = vdwg.mxu0
    %v363 = vpack.c.bf16 %v180, %v179
    %v364 = vpack.c.bf16 %v182, %v181
    %s365 = scalar_lea.vmem [#allocation5], 64
    %v366 = vld [vmem:[%s365] sm:$0xf]
    %v367 = vld [vmem:[%s365 + $0x4] sm:$0xf]
    %v368 = vld [vmem:[%s365 + $0x8] sm:$0xf]
    %v369 = vld [vmem:[%s365 + $0xc] sm:$0xf]
    %v370 = vld [vmem:[%s365 + $0x10] sm:$0xf]
    %v371 = vld [vmem:[%s365 + $0x14] sm:$0xf]
    %v372 = vld [vmem:[%s365 + $0x18] sm:$0xf]
    %v373 = vld [vmem:[%s365 + $0x1c] sm:$0xf]
    %v382 = vunpack.c.l.b16 %v366
    %v383 = vunpack.c.l.b16 %v367
    %v384 = vunpack.c.l.b16 %v368
    %v385 = vunpack.c.l.b16 %v369
    %v386 = vunpack.c.l.b16 %v370
    %v387 = vunpack.c.l.b16 %v371
    %v388 = vunpack.c.l.b16 %v372
    %v389 = vunpack.c.l.b16 %v373
    %v390 = vpack.c.b16 %v383, %v382
    %v391 = vpack.c.b16 %v385, %v384
    %v392 = vpack.c.b16 %v387, %v386
    %v393 = vpack.c.b16 %v389, %v388
    %v399 = vsel %vm228, %v363, 0
    %v402 = vsel %vm228, %v364, 0
    %404 = vmatprep.subr.bf16.mxu0 0
    %405 = vmatpush1.bf16.msra.mxu0 %v390
    %406 = vmatprep.subr.bf16.mxu0 0
    %407 = vmatpush1.bf16.msra.mxu0 %v391
    %408 = vmatprep.subr.bf16.mxu0 0
    %409 = vmatpush1.bf16.msra.mxu0 %v392
    %410 = vmatprep.subr.bf16.mxu0 0
    %411 = vmatpush1.bf16.msra.mxu0 %v393
    %412 = vmatprep.subr.bf16.mxu0 0
    %413 = vmatpush1.bf16.msra.mxu0 0
    %414 = vmatprep.subr.bf16.mxu0 0
    %415 = vmatpush1.bf16.msra.mxu0 0
    %416 = vmatprep.subr.bf16.mxu0 0
    %417 = vmatpush1.bf16.msra.mxu0 0
    %418 = vmatprep.subr.bf16.mxu0 0
    %419 = vmatpush1.bf16.msra.mxu0 0
    %420 = vmatprep.subr.bf16.mxu0 0
    %421 = vmatpush1.bf16.msra.mxu0 0
    %422 = vmatprep.subr.bf16.mxu0 0
    %423 = vmatpush1.bf16.msra.mxu0 0
    %424 = vmatprep.subr.bf16.mxu0 0
    %425 = vmatpush1.bf16.msra.mxu0 0
    %426 = vmatprep.subr.bf16.mxu0 0
    %427 = vmatpush1.bf16.msra.mxu0 0
    %428 = vmatprep.subr.bf16.mxu0 0
    %429 = vmatpush1.bf16.msra.mxu0 0
    %430 = vmatprep.subr.bf16.mxu0 0
    %431 = vmatpush1.bf16.msra.mxu0 0
    %432 = vmatprep.subr.bf16.mxu0 0
    %433 = vmatpush1.bf16.msra.mxu0 0
    %434 = vmatprep.subr.bf16.mxu0 0
    %435 = vmatpush1.bf16.msra.mxu0 0
    %436 = vmatprep.mubr.bf16.mxu0 0
    %437 = vmatmul.mubr.bf16.gmra.mrb[0].mxu0 %v399
    %v438 = vpop.f32.mrb[0].mxu0
    %v439 = vadd.f32 0.0, %v438
    %v440 = vpop.f32.mrb[0].mxu0
    %v441 = vpop.f32.mrb[0].mxu0
    %v442 = vadd.f32 0.0, %v441
    %v443 = vpop.f32.mrb[0].mxu0
    %444 = vmatprep.mubr.bf16.mxu0 0
    %445 = vmatmul.mubr.bf16.gmra.mrb[0].mxu0 %v402
    %v446 = vpop.f32.mrb[0].mxu0
    %v447 = vadd.f32 0.0, %v446
    %v448 = vpop.f32.mrb[0].mxu0
    %v449 = vpop.f32.mrb[0].mxu0
    %v450 = vadd.f32 0.0, %v449
    %v451 = vpop.f32.mrb[0].mxu0
    %452 = vdwg.mxu0
    %v453 = vadd.f32 %v349, %v439
    %v454 = vadd.f32 %v352, %v442
    %v455 = vadd.f32 %v357, %v447
    %v456 = vadd.f32 %v360, %v450
    %v458 = vlaneseq
    %v459 = vshrl.u32 %v458, 7
    %v460 = vsub.s32 0, %v459
    %v461 = vrot.slane %v128, %v460
    %v463 = vadd.f32 %v453, %v461
    %v464 = vadd.f32 %v454, %v461
    %v465 = vadd.f32 %v455, %v461
    %v466 = vadd.f32 %v456, %v461
    %v467 = vmax.f32 %v463, 0.0
    %v468 = vmax.f32 %v464, 0.0
    %v469 = vmax.f32 %v465, 0.0
    %v470 = vmax.f32 %v466, 0.0
    %v471 = vld [vmem:[%s4] sm:$0x1]
    %v476 = vrot.slane %v467, 7
    %v477 = vrot.slane %v468, 7
    %v478 = vsel %vm133, %v476, %v477
    %v479 = vrot.slane %v469, 7
    %v480 = vsel %vm133, %v477, %v479
    %v481 = vrot.slane %v470, 7
    %v482 = vsel %vm133, %v479, %v481
    %v487 = vsel %vm133, 0.0, %v476
    %v488 = vsel %vm150, 0.0, %v487
    %v489 = vsel %vm151, 0.0, %v478
    %v490 = vsel %vm152, 0.0, %v480
    %v491 = vsel %vm153, 0.0, %v482
    %v492 = vrot.slane %v467, 1
    %v493 = vrot.slane %v468, 1
    %v494 = vsel %vm158, %v492, %v493
    %v495 = vrot.slane %v469, 1
    %v496 = vsel %vm158, %v493, %v495
    %v497 = vrot.slane %v470, 1
    %v498 = vsel %vm158, %v495, %v497
    %v503 = vsel %vm158, %v497, 0.0
    %v504 = vsel %vm175, 0.0, %v494
    %v505 = vsel %vm176, 0.0, %v496
    %v506 = vsel %vm177, 0.0, %v498
    %v507 = vsel %vm178, 0.0, %v503
    %v508 = vpack.c.bf16 %v468, %v467
    %v509 = vpack.c.bf16 %v470, %v469
    %s510 = scalar_lea.vmem [#allocation7], 64
    %v511 = vld [vmem:[%s510] sm:$0xf]
    %v512 = vld [vmem:[%s510 + $0x4] sm:$0xf]
    %v513 = vld [vmem:[%s510 + $0x8] sm:$0xf]
    %v514 = vld [vmem:[%s510 + $0xc] sm:$0xf]
    %v515 = vld [vmem:[%s510 + $0x10] sm:$0xf]
    %v516 = vld [vmem:[%s510 + $0x14] sm:$0xf]
    %v517 = vld [vmem:[%s510 + $0x18] sm:$0xf]
    %v518 = vld [vmem:[%s510 + $0x1c] sm:$0xf]
    %v519 = vld [vmem:[%s510 + $0x20] sm:$0xf]
    %v520 = vld [vmem:[%s510 + $0x24] sm:$0xf]
    %v521 = vld [vmem:[%s510 + $0x28] sm:$0xf]
    %v522 = vld [vmem:[%s510 + $0x2c] sm:$0xf]
    %v523 = vld [vmem:[%s510 + $0x30] sm:$0xf]
    %v524 = vld [vmem:[%s510 + $0x34] sm:$0xf]
    %v525 = vld [vmem:[%s510 + $0x38] sm:$0xf]
    %v526 = vld [vmem:[%s510 + $0x3c] sm:$0xf]
    %v527 = vpack.c.bf16 %v489, %v488
    %v528 = vpack.c.bf16 %v491, %v490
    %v529 = vld [vmem:[#allocation7] sm:$0xf]
    %v530 = vld [vmem:[#allocation7 + $0x4] sm:$0xf]
    %v531 = vld [vmem:[#allocation7 + $0x8] sm:$0xf]
    %v532 = vld [vmem:[#allocation7 + $0xc] sm:$0xf]
    %v533 = vld [vmem:[#allocation7 + $0x10] sm:$0xf]
    %v534 = vld [vmem:[#allocation7 + $0x14] sm:$0xf]
    %v535 = vld [vmem:[#allocation7 + $0x18] sm:$0xf]
    %v536 = vld [vmem:[#allocation7 + $0x1c] sm:$0xf]
    %v537 = vld [vmem:[#allocation7 + $0x20] sm:$0xf]
    %v538 = vld [vmem:[#allocation7 + $0x24] sm:$0xf]
    %v539 = vld [vmem:[#allocation7 + $0x28] sm:$0xf]
    %v540 = vld [vmem:[#allocation7 + $0x2c] sm:$0xf]
    %v541 = vld [vmem:[#allocation7 + $0x30] sm:$0xf]
    %v542 = vld [vmem:[#allocation7 + $0x34] sm:$0xf]
    %v543 = vld [vmem:[#allocation7 + $0x38] sm:$0xf]
    %v544 = vld [vmem:[#allocation7 + $0x3c] sm:$0xf]
    %v561 = vunpack.c.l.b16 %v529
    %v562 = vunpack.c.l.b16 %v530
    %v563 = vunpack.c.l.b16 %v531
    %v564 = vunpack.c.l.b16 %v532
    %v565 = vunpack.c.l.b16 %v533
    %v566 = vunpack.c.l.b16 %v534
    %v567 = vunpack.c.l.b16 %v535
    %v568 = vunpack.c.l.b16 %v536
    %v569 = vunpack.c.l.b16 %v537
    %v570 = vunpack.c.l.b16 %v538
    %v571 = vunpack.c.l.b16 %v539
    %v572 = vunpack.c.l.b16 %v540
    %v573 = vunpack.c.l.b16 %v541
    %v574 = vunpack.c.l.b16 %v542
    %v575 = vunpack.c.l.b16 %v543
    %v576 = vunpack.c.l.b16 %v544
    %v577 = vpack.c.b16 %v562, %v561
    %v578 = vpack.c.b16 %v564, %v563
    %v579 = vpack.c.b16 %v566, %v565
    %v580 = vpack.c.b16 %v568, %v567
    %v581 = vpack.c.b16 %v570, %v569
    %v582 = vpack.c.b16 %v572, %v571
    %v583 = vpack.c.b16 %v574, %v573
    %v584 = vpack.c.b16 %v576, %v575
    %593 = vmatprep.subr.bf16.mxu0 0
    %594 = vmatpush1.bf16.msra.mxu0 %v577
    %595 = vmatprep.subr.bf16.mxu0 0
    %596 = vmatpush1.bf16.msra.mxu0 %v578
    %597 = vmatprep.subr.bf16.mxu0 0
    %598 = vmatpush1.bf16.msra.mxu0 %v579
    %599 = vmatprep.subr.bf16.mxu0 0
    %600 = vmatpush1.bf16.msra.mxu0 %v580
    %601 = vmatprep.subr.bf16.mxu0 0
    %602 = vmatpush1.bf16.msra.mxu0 %v581
    %603 = vmatprep.subr.bf16.mxu0 0
    %604 = vmatpush1.bf16.msra.mxu0 %v582
    %605 = vmatprep.subr.bf16.mxu0 0
    %606 = vmatpush1.bf16.msra.mxu0 %v583
    %607 = vmatprep.subr.bf16.mxu0 0
    %608 = vmatpush1.bf16.msra.mxu0 %v584
    %609 = vmatprep.subr.bf16.mxu0 0
    %610 = vmatpush1.bf16.msra.mxu0 0
    %611 = vmatprep.subr.bf16.mxu0 0
    %612 = vmatpush1.bf16.msra.mxu0 0
    %613 = vmatprep.subr.bf16.mxu0 0
    %614 = vmatpush1.bf16.msra.mxu0 0
    %615 = vmatprep.subr.bf16.mxu0 0
    %616 = vmatpush1.bf16.msra.mxu0 0
    %617 = vmatprep.subr.bf16.mxu0 0
    %618 = vmatpush1.bf16.msra.mxu0 0
    %619 = vmatprep.subr.bf16.mxu0 0
    %620 = vmatpush1.bf16.msra.mxu0 0
    %621 = vmatprep.subr.bf16.mxu0 0
    %622 = vmatpush1.bf16.msra.mxu0 0
    %623 = vmatprep.subr.bf16.mxu0 0
    %624 = vmatpush1.bf16.msra.mxu0 0
    %625 = vmatprep.mubr.bf16.mxu0 0
    %626 = vmatmul.mubr.bf16.gmra.mrb[0].mxu0 %v527
    %v627 = vpop.f32.mrb[0].mxu0
    %v628 = vadd.f32 0.0, %v627
    %v629 = vpop.f32.mrb[0].mxu0
    %v630 = vpop.f32.mrb[0].mxu0
    %v631 = vadd.f32 0.0, %v630
    %v632 = vpop.f32.mrb[0].mxu0
    %633 = vmatprep.mubr.bf16.mxu0 0
    %634 = vmatmul.mubr.bf16.gmra.mrb[0].mxu0 %v528
    %v635 = vpop.f32.mrb[0].mxu0
    %v636 = vadd.f32 0.0, %v635
    %v637 = vpop.f32.mrb[0].mxu0
    %v638 = vpop.f32.mrb[0].mxu0
    %v639 = vadd.f32 0.0, %v638
    %v640 = vpop.f32.mrb[0].mxu0
    %641 = vdwg.mxu0
    %v658 = vunpack.c.l.b16 %v511
    %v659 = vunpack.c.l.b16 %v512
    %v660 = vunpack.c.l.b16 %v513
    %v661 = vunpack.c.l.b16 %v514
    %v662 = vunpack.c.l.b16 %v515
    %v663 = vunpack.c.l.b16 %v516
    %v664 = vunpack.c.l.b16 %v517
    %v665 = vunpack.c.l.b16 %v518
    %v666 = vunpack.c.l.b16 %v519
    %v667 = vunpack.c.l.b16 %v520
    %v668 = vunpack.c.l.b16 %v521
    %v669 = vunpack.c.l.b16 %v522
    %v670 = vunpack.c.l.b16 %v523
    %v671 = vunpack.c.l.b16 %v524
    %v672 = vunpack.c.l.b16 %v525
    %v673 = vunpack.c.l.b16 %v526
    %v674 = vpack.c.b16 %v659, %v658
    %v675 = vpack.c.b16 %v661, %v660
    %v676 = vpack.c.b16 %v663, %v662
    %v677 = vpack.c.b16 %v665, %v664
    %v678 = vpack.c.b16 %v667, %v666
    %v679 = vpack.c.b16 %v669, %v668
    %v680 = vpack.c.b16 %v671, %v670
    %v681 = vpack.c.b16 %v673, %v672
    %690 = vmatprep.subr.bf16.mxu0 0
    %691 = vmatpush1.bf16.msra.mxu0 %v674
    %692 = vmatprep.subr.bf16.mxu0 0
    %693 = vmatpush1.bf16.msra.mxu0 %v675
    %694 = vmatprep.subr.bf16.mxu0 0
    %695 = vmatpush1.bf16.msra.mxu0 %v676
    %696 = vmatprep.subr.bf16.mxu0 0
    %697 = vmatpush1.bf16.msra.mxu0 %v677
    %698 = vmatprep.subr.bf16.mxu0 0
    %699 = vmatpush1.bf16.msra.mxu0 %v678
    %700 = vmatprep.subr.bf16.mxu0 0
    %701 = vmatpush1.bf16.msra.mxu0 %v679
    %702 = vmatprep.subr.bf16.mxu0 0
    %703 = vmatpush1.bf16.msra.mxu0 %v680
    %704 = vmatprep.subr.bf16.mxu0 0
    %705 = vmatpush1.bf16.msra.mxu0 %v681
    %706 = vmatprep.subr.bf16.mxu0 0
    %707 = vmatpush1.bf16.msra.mxu0 0
    %708 = vmatprep.subr.bf16.mxu0 0
    %709 = vmatpush1.bf16.msra.mxu0 0
    %710 = vmatprep.subr.bf16.mxu0 0
    %711 = vmatpush1.bf16.msra.mxu0 0
    %712 = vmatprep.subr.bf16.mxu0 0
    %713 = vmatpush1.bf16.msra.mxu0 0
    %714 = vmatprep.subr.bf16.mxu0 0
    %715 = vmatpush1.bf16.msra.mxu0 0
    %716 = vmatprep.subr.bf16.mxu0 0
    %717 = vmatpush1.bf16.msra.mxu0 0
    %718 = vmatprep.subr.bf16.mxu0 0
    %719 = vmatpush1.bf16.msra.mxu0 0
    %720 = vmatprep.subr.bf16.mxu0 0
    %721 = vmatpush1.bf16.msra.mxu0 0
    %722 = vmatprep.mubr.bf16.mxu0 0
    %723 = vmatmul.mubr.bf16.gmra.mrb[0].mxu0 %v508
    %v724 = vpop.f32.mrb[0].mxu0
    %v725 = vadd.f32 %v628, %v724
    %v726 = vpop.f32.mrb[0].mxu0
    %v727 = vpop.f32.mrb[0].mxu0
    %v728 = vadd.f32 %v631, %v727
    %v729 = vpop.f32.mrb[0].mxu0
    %730 = vmatprep.mubr.bf16.mxu0 0
    %731 = vmatmul.mubr.bf16.gmra.mrb[0].mxu0 %v509
    %v732 = vpop.f32.mrb[0].mxu0
    %v733 = vadd.f32 %v636, %v732
    %v734 = vpop.f32.mrb[0].mxu0
    %v735 = vpop.f32.mrb[0].mxu0
    %v736 = vadd.f32 %v639, %v735
    %v737 = vpop.f32.mrb[0].mxu0
    %738 = vdwg.mxu0
    %v739 = vpack.c.bf16 %v505, %v504
    %v740 = vpack.c.bf16 %v507, %v506
    %s741 = scalar_lea.vmem [#allocation7], 128
    %v742 = vld [vmem:[%s741] sm:$0xf]
    %v743 = vld [vmem:[%s741 + $0x4] sm:$0xf]
    %v744 = vld [vmem:[%s741 + $0x8] sm:$0xf]
    %v745 = vld [vmem:[%s741 + $0xc] sm:$0xf]
    %v746 = vld [vmem:[%s741 + $0x10] sm:$0xf]
    %v747 = vld [vmem:[%s741 + $0x14] sm:$0xf]
    %v748 = vld [vmem:[%s741 + $0x18] sm:$0xf]
    %v749 = vld [vmem:[%s741 + $0x1c] sm:$0xf]
    %v750 = vld [vmem:[%s741 + $0x20] sm:$0xf]
    %v751 = vld [vmem:[%s741 + $0x24] sm:$0xf]
    %v752 = vld [vmem:[%s741 + $0x28] sm:$0xf]
    %v753 = vld [vmem:[%s741 + $0x2c] sm:$0xf]
    %v754 = vld [vmem:[%s741 + $0x30] sm:$0xf]
    %v755 = vld [vmem:[%s741 + $0x34] sm:$0xf]
    %v756 = vld [vmem:[%s741 + $0x38] sm:$0xf]
    %v757 = vld [vmem:[%s741 + $0x3c] sm:$0xf]
    %v774 = vunpack.c.l.b16 %v742
    %v775 = vunpack.c.l.b16 %v743
    %v776 = vunpack.c.l.b16 %v744
    %v777 = vunpack.c.l.b16 %v745
    %v778 = vunpack.c.l.b16 %v746
    %v779 = vunpack.c.l.b16 %v747
    %v780 = vunpack.c.l.b16 %v748
    %v781 = vunpack.c.l.b16 %v749
    %v782 = vunpack.c.l.b16 %v750
    %v783 = vunpack.c.l.b16 %v751
    %v784 = vunpack.c.l.b16 %v752
    %v785 = vunpack.c.l.b16 %v753
    %v786 = vunpack.c.l.b16 %v754
    %v787 = vunpack.c.l.b16 %v755
    %v788 = vunpack.c.l.b16 %v756
    %v789 = vunpack.c.l.b16 %v757
    %v790 = vpack.c.b16 %v775, %v774
    %v791 = vpack.c.b16 %v777, %v776
    %v792 = vpack.c.b16 %v779, %v778
    %v793 = vpack.c.b16 %v781, %v780
    %v794 = vpack.c.b16 %v783, %v782
    %v795 = vpack.c.b16 %v785, %v784
    %v796 = vpack.c.b16 %v787, %v786
    %v797 = vpack.c.b16 %v789, %v788
    %806 = vmatprep.subr.bf16.mxu0 0
    %807 = vmatpush1.bf16.msra.mxu0 %v790
    %808 = vmatprep.subr.bf16.mxu0 0
    %809 = vmatpush1.bf16.msra.mxu0 %v791
    %810 = vmatprep.subr.bf16.mxu0 0
    %811 = vmatpush1.bf16.msra.mxu0 %v792
    %812 = vmatprep.subr.bf16.mxu0 0
    %813 = vmatpush1.bf16.msra.mxu0 %v793
    %814 = vmatprep.subr.bf16.mxu0 0
    %815 = vmatpush1.bf16.msra.mxu0 %v794
    %816 = vmatprep.subr.bf16.mxu0 0
    %817 = vmatpush1.bf16.msra.mxu0 %v795
    %818 = vmatprep.subr.bf16.mxu0 0
    %819 = vmatpush1.bf16.msra.mxu0 %v796
    %820 = vmatprep.subr.bf16.mxu0 0
    %821 = vmatpush1.bf16.msra.mxu0 %v797
    %822 = vmatprep.subr.bf16.mxu0 0
    %823 = vmatpush1.bf16.msra.mxu0 0
    %824 = vmatprep.subr.bf16.mxu0 0
    %825 = vmatpush1.bf16.msra.mxu0 0
    %826 = vmatprep.subr.bf16.mxu0 0
    %827 = vmatpush1.bf16.msra.mxu0 0
    %828 = vmatprep.subr.bf16.mxu0 0
    %829 = vmatpush1.bf16.msra.mxu0 0
    %830 = vmatprep.subr.bf16.mxu0 0
    %831 = vmatpush1.bf16.msra.mxu0 0
    %832 = vmatprep.subr.bf16.mxu0 0
    %833 = vmatpush1.bf16.msra.mxu0 0
    %834 = vmatprep.subr.bf16.mxu0 0
    %835 = vmatpush1.bf16.msra.mxu0 0
    %836 = vmatprep.subr.bf16.mxu0 0
    %837 = vmatpush1.bf16.msra.mxu0 0
    %838 = vmatprep.mubr.bf16.mxu0 0
    %839 = vmatmul.mubr.bf16.gmra.mrb[0].mxu0 %v739
    %v840 = vpop.f32.mrb[0].mxu0
    %v841 = vadd.f32 0.0, %v840
    %v842 = vpop.f32.mrb[0].mxu0
    %v843 = vpop.f32.mrb[0].mxu0
    %v844 = vadd.f32 0.0, %v843
    %v845 = vpop.f32.mrb[0].mxu0
    %846 = vmatprep.mubr.bf16.mxu0 0
    %847 = vmatmul.mubr.bf16.gmra.mrb[0].mxu0 %v740
    %v848 = vpop.f32.mrb[0].mxu0
    %v849 = vadd.f32 0.0, %v848
    %v850 = vpop.f32.mrb[0].mxu0
    %v851 = vpop.f32.mrb[0].mxu0
    %v852 = vadd.f32 0.0, %v851
    %v853 = vpop.f32.mrb[0].mxu0
    %854 = vdwg.mxu0
    %v855 = vadd.f32 %v725, %v841
    %v856 = vadd.f32 %v728, %v844
    %v857 = vadd.f32 %v733, %v849
    %v858 = vadd.f32 %v736, %v852
    %v860 = vlaneseq
    %v861 = vshrl.u32 %v860, 7
    %v862 = vsub.s32 0, %v861
    %v863 = vrot.slane %v471, %v862
    %v865 = vadd.f32 %v855, %v863
    %v866 = vadd.f32 %v856, %v863
    %v867 = vadd.f32 %v857, %v863
    %v868 = vadd.f32 %v858, %v863
    %v869 = vmax.f32 %v865, 0.0
    %v870 = vmax.f32 %v866, 0.0
    %v871 = vmax.f32 %v867, 0.0
    %v872 = vmax.f32 %v868, 0.0
    %873 = vst [vmem:[#allocation8] sm:$0xff] %v869
    %874 = vst [vmem:[#allocation8 + $0x8] sm:$0xff] %v870
    %875 = vst [vmem:[#allocation8 + $0x10] sm:$0xff] %v871
    %876 = vst [vmem:[#allocation8 + $0x18] sm:$0xff] %v872
    // Predicated region
    $region34: #{tpu_custom_call.1} parent=1 // pred_check
      _
    $region35: #{tpu_custom_call.1} parent=1 // pred_check_branch
      %878 = sbr.rel (0) target = $region37
    $region36: #{tpu_custom_call.1} parent=1 // pred_region
      %s880 = ssub.s32 512, 512
      %881 = vsyncadd [#allocation4], %s880
      %s882 = sshll.u32 [#allocation8], 4
      %s883 = int_to_ptr.vmem [resolvable:$true] %s882
      %888 = dma.vmem_to_hbm [thread:$0]  %s883, 512, %s5, [#allocation4], 128, 128, 8
    $region37: #{tpu_custom_call.1} parent=1 // pred_fallthru
      _
    // Predicated region
    $region38: #{tpu_custom_call.1} parent=1 // pred_check
      _
    $region39: #{tpu_custom_call.1} parent=1 // pred_check_branch
      %890 = sbr.rel (0) target = $region41
    $region40: #{tpu_custom_call.1} parent=1 // pred_region
      %891 = dma.done [#allocation4], 512
    $region41: #{tpu_custom_call.1} parent=1 // pred_fallthru
      _
    %892 = vsyncpa [#allocation3], 1
    %893 = vsyncpa [#allocation6], 1
    %894 = vsyncpa [#allocation4], 1

</llo_original>
